<compile_context>
chip_gen: v7x
topology: tpu7x:2x2x1
jax: 0.10.0
libtpu: 0.0.40
codegen_flags: <defaults>
</compile_context>

<pallas_src>
import functools

import jax
import jax.numpy as jnp
from jax.experimental import pallas as pl
from jax.experimental.pallas import tpu as pltpu


def _round_up(x, m):
    return ((x + m - 1) // m) * m


def _log_sigmoid(x):
    # log(sigmoid(x)) = min(x, 0) - log1p(exp(-|x|)); numerically stable and
    # log1p is more accurate than log(1 + .) near zero.
    return jnp.minimum(x, 0.0) - jnp.log1p(jnp.exp(-jnp.abs(x)))


def _vmem_capacity_bytes():
    """Physical VMEM of the current chip, with a conservative fallback."""
    try:
        info = pltpu.get_tpu_info()
        cap = int(getattr(info, "vmem_capacity_bytes", 0))
        if cap > 0:
            return cap
    except Exception:
        pass
    return 64 << 20  # conservative default (v7x per-TC VMEM)


def _sgns_loss_kernel(inp_ref, tgt_ref, noise_ref, out_ref, *,
                      total_b, tile_b, n_noise, n_chunk):
    # Upcast (TB, E) operands in-kernel; inputs may be bf16 in HBM, which
    # halves HBM traffic vs. upcasting in the wrapper.
    inp = inp_ref[...].astype(jnp.float32)       # (TB, E)
    tgt = tgt_ref[...].astype(jnp.float32)       # (TB, E)

    # target term: log(sigmoid(target . input))                       -> (TB, 1)
    per_row = _log_sigmoid(jnp.sum(inp * tgt, axis=-1, keepdims=True))

    # noise term: sum_n log(sigmoid(-(noise_n . input))).
    # Processed in sublane-aligned static chunks along N so that only a
    # (TB, n_chunk, E) f32 slab is live at a time -- no (TB, N, E) f32 copy,
    # and the broadcast of `inp` only spans <= n_chunk sublanes.
    for start in range(0, n_noise, n_chunk):
        size = min(n_chunk, n_noise - start)
        chunk = noise_ref[:, start:start + size, :].astype(jnp.float32)  # (TB, size, E)
        nd = jnp.sum(chunk * inp[:, None, :], axis=-1)                   # (TB, size)
        per_row = per_row + jnp.sum(_log_sigmoid(-nd), axis=-1, keepdims=True)

    # Mask rows past the true batch size (edge tile only; static check).
    # NOTE: masking must stay BEFORE the reduction, and must use jnp.where
    # (NaN-safe) so garbage OOB rows cannot poison the sum.
    if total_b % tile_b != 0:
        i = pl.program_id(0)
        row_ids = jax.lax.broadcasted_iota(jnp.int32, (tile_b, 1), 0)
        valid = (i * tile_b + row_ids) < total_b
        per_row = jnp.where(valid, per_row, 0.0)

    partial = jnp.sum(per_row)
    # Independent per-tile lane-dense (8, 128) output block (unmasked store;
    # parallel-safe across tiles).  Every lane holds the same partial.
    out_ref[...] = jnp.full(out_ref.shape, partial, dtype=out_ref.dtype)


def sgns_loss(embedded_input_words, embedded_target_words, embedded_noise_words):
    inp = embedded_input_words
    tgt = embedded_target_words
    noise = embedded_noise_words

    B, E = inp.shape
    _, N, _ = noise.shape

    # --- chip-aware VMEM budget ----------------------------------------------
    vmem_cap = _vmem_capacity_bytes()
    if vmem_cap >= (100 << 20):
        # v5e / v6e: 128 MiB physical VMEM -> allow a large scoped limit.
        scoped_cap = 96 << 20
        multi_tc_likely = False
    else:
        # v7x: 64 MiB per TensorCore, 2 TCs per chip.
        scoped_cap = min(48 << 20, (vmem_cap * 3) // 4)
        multi_tc_likely = True

    # --- choose the batch tile from the per-tile VMEM budget -----------------
    # Lane/sublane-padded footprints. Double-buffered native-dtype input
    # blocks + in-kernel f32 temporaries should fit ~65% of the scoped limit.
    e_pad = _round_up(E, 128)
    n_pad = _round_up(N, 8)
    n_chunk = 8  # sublane-aligned chunk along N inside the kernel

    noise_row_native = n_pad * e_pad * jnp.dtype(noise.dtype).itemsize
    io_row_native = e_pad * (jnp.dtype(inp.dtype).itemsize
                             + jnp.dtype(tgt.dtype).itemsize)
    row_native = noise_row_native + io_row_native
    # f32 temporaries per row: one chunk + its product (2 * n_chunk * e_pad)
    # plus inp/tgt f32 copies and small (TB, 1) accumulators + slack.
    row_temp_f32 = (2 * min(n_pad, n_chunk) + 8) * e_pad * 4

    budget = int(scoped_cap * 0.65)
    per_row_cost = 2 * row_native + row_temp_f32          # 2x = double buffering
    cap = max(8, (budget // per_row_cost) // 8 * 8)
    tile_b = min(cap, (B // 8) * 8) if B >= 8 else B       # multiple of 8 (or full B)

    # On multi-TensorCore chips keep >= 2 tiles so the "parallel" batch axis
    # actually shards across both cores.
    if multi_tc_likely and B >= 16 and pl.cdiv(B, tile_b) < 2:
        tile_b = min(tile_b, max(8, _round_up(pl.cdiv(B, 2), 8)))

    num_tiles = pl.cdiv(B, tile_b)

    tile_native = tile_b * row_native
    tile_temp_f32 = tile_b * row_temp_f32
    vmem_limit = int(min(scoped_cap,
                         max(16 << 20, 2 * tile_native + tile_temp_f32 + (4 << 20))))

    kernel = functools.partial(_sgns_loss_kernel, total_b=B, tile_b=tile_b,
                               n_noise=N, n_chunk=n_chunk)

    partials = pl.pallas_call(
        kernel,
        out_shape=jax.ShapeDtypeStruct((num_tiles, 8, 128), jnp.float32),
        grid=(num_tiles,),
        in_specs=[
            pl.BlockSpec((tile_b, E), lambda i: (i, 0)),
            pl.BlockSpec((tile_b, E), lambda i: (i, 0)),
            pl.BlockSpec((tile_b, N, E), lambda i: (i, 0, 0)),
        ],
        out_specs=pl.BlockSpec((1, 8, 128), lambda i: (i, 0, 0)),
        compiler_params=pltpu.CompilerParams(
            dimension_semantics=("parallel",),
            vmem_limit_bytes=vmem_limit,
        ),
    )(inp, tgt, noise)

    # Every lane of each (8, 128) block holds the same per-tile partial, so
    # reduce the whole lane-dense slab (no strided gather) and normalize by
    # the 8*128 replication and the GLOBAL batch size.
    return -(jnp.sum(partials) / (8.0 * 128.0 * B))


def sgns_loss_ref(inp, tgt, noise):
    """Pure-JAX reference for checking."""
    inp = inp.astype(jnp.float32)
    tgt = tgt.astype(jnp.float32)
    noise = noise.astype(jnp.float32)
    tgt_dot = jnp.sum(inp * tgt, axis=-1)
    target_loss = jnp.log(jax.nn.sigmoid(tgt_dot))
    noise_dot = jnp.einsum("bne,be->bn", -noise, inp)
    noise_loss = jnp.sum(jnp.log(jax.nn.sigmoid(noise_dot)), axis=-1)
    return -jnp.mean(target_loss + noise_loss)


if __name__ == "__main__":
    key = jax.random.PRNGKey(0)

    # Test 1: aligned batch, float32 embeddings.
    B, N, E = 8, 4, 32
    k1, k2, k3, k4 = jax.random.split(key, 4)
    inp = jax.random.normal(k1, (B, E), dtype=jnp.float32)
    tgt = jax.random.normal(k2, (B, E), dtype=jnp.float32)
    noise = jax.random.normal(k3, (B, N, E), dtype=jnp.float32)

    loss = sgns_loss(inp, tgt, noise)
    jax.block_until_ready(loss)
    ref = sgns_loss_ref(inp, tgt, noise)
    assert jnp.allclose(loss, ref, rtol=1e-5, atol=1e-5), (loss, ref)

    # Test 2: ragged batch (exercises edge-tile masking) with bf16 embeddings
    # (exercises the in-kernel upcast path).
    B2, N2, E2 = 20, 4, 32
    k5, k6, k7 = jax.random.split(k4, 3)
    inp2 = jax.random.normal(k5, (B2, E2), dtype=jnp.float32).astype(jnp.bfloat16)
    tgt2 = jax.random.normal(k6, (B2, E2), dtype=jnp.float32).astype(jnp.bfloat16)
    noise2 = jax.random.normal(k7, (B2, N2, E2), dtype=jnp.float32).astype(jnp.bfloat16)

    loss2 = sgns_loss(inp2, tgt2, noise2)
    jax.block_until_ready(loss2)
    ref2 = sgns_loss_ref(inp2, tgt2, noise2)
    assert jnp.allclose(loss2, ref2, rtol=1e-4, atol=1e-4), (loss2, ref2)

    print("KERNEL_OK")
</pallas_src>

<mosaic_0001>
module attributes {stable_mosaic.version = 11 : i64} {
  func.func @_sgns_loss_kernel(%arg0: i32, %arg1: memref<8x32xf32, #tpu.memory_space<vmem>>, %arg2: memref<8x32xf32, #tpu.memory_space<vmem>>, %arg3: memref<8x4x32xf32, #tpu.memory_space<vmem>>, %arg4: memref<1x8x128xf32, #tpu.memory_space<vmem>>) attributes {dimension_semantics = [#tpu.dimension_semantics<parallel>], iteration_bounds = array<i64: 1>, scalar_prefetch = 0 : i64, scratch_operands = 0 : i64, tpu.core_type = #tpu.core_type<tc>, window_params = [{transform_indices = @transform_0, window_bounds = array<i64: 8, 32>}, {transform_indices = @transform_1, window_bounds = array<i64: 8, 32>}, {transform_indices = @transform_2, window_bounds = array<i64: 8, 4, 32>}, {transform_indices = @transform_3, window_bounds = array<i64: 1, 8, 128>}]} {
    %c0 = arith.constant 0 : index
    %c0_0 = arith.constant 0 : index
    %0 = vector.load %arg1[%c0, %c0_0] : memref<8x32xf32, #tpu.memory_space<vmem>>, vector<8x32xf32>
    %c0_1 = arith.constant 0 : index
    %c0_2 = arith.constant 0 : index
    %1 = vector.load %arg2[%c0_1, %c0_2] : memref<8x32xf32, #tpu.memory_space<vmem>>, vector<8x32xf32>
    %2 = arith.mulf %0, %1 : vector<8x32xf32>
    %cst = arith.constant dense<0.000000e+00> : vector<8xf32>
    %3 = vector.multi_reduction <add>, %2, %cst [1] : vector<8x32xf32> to vector<8xf32>
    %4 = vector.shape_cast %3 : vector<8xf32> to vector<8x1xf32>
    %cst_3 = arith.constant 0.000000e+00 : f32
    %5 = vector.broadcast %cst_3 : f32 to vector<8x1xf32>
    %6 = arith.minimumf %4, %5 : vector<8x1xf32>
    %7 = math.absf %4 : vector<8x1xf32>
    %cst_4 = arith.constant 0.000000e+00 : f32
    %8 = vector.broadcast %cst_4 : f32 to vector<8x1xf32>
    %9 = arith.subf %8, %7 : vector<8x1xf32>
    %10 = math.exp %9 : vector<8x1xf32>
    %11 = math.log1p %10 : vector<8x1xf32>
    %12 = arith.subf %6, %11 : vector<8x1xf32>
    %c0_5 = arith.constant 0 : index
    %c0_6 = arith.constant 0 : index
    %c0_7 = arith.constant 0 : index
    %13 = vector.load %arg3[%c0_5, %c0_6, %c0_7] : memref<8x4x32xf32, #tpu.memory_space<vmem>>, vector<8x4x32xf32>
    %14 = vector.shape_cast %0 : vector<8x32xf32> to vector<8x1x32xf32>
    %15 = vector.broadcast %14 : vector<8x1x32xf32> to vector<8x4x32xf32>
    %16 = arith.mulf %13, %15 : vector<8x4x32xf32>
    %cst_8 = arith.constant dense<0.000000e+00> : vector<8x4xf32>
    %17 = vector.multi_reduction <add>, %16, %cst_8 [2] : vector<8x4x32xf32> to vector<8x4xf32>
    %cst_9 = arith.constant 0.000000e+00 : f32
    %18 = vector.broadcast %cst_9 : f32 to vector<8x4xf32>
    %19 = arith.subf %18, %17 : vector<8x4xf32>
    %cst_10 = arith.constant 0.000000e+00 : f32
    %20 = vector.broadcast %cst_10 : f32 to vector<8x4xf32>
    %21 = arith.minimumf %19, %20 : vector<8x4xf32>
    %22 = math.absf %19 : vector<8x4xf32>
    %cst_11 = arith.constant 0.000000e+00 : f32
    %23 = vector.broadcast %cst_11 : f32 to vector<8x4xf32>
    %24 = arith.subf %23, %22 : vector<8x4xf32>
    %25 = math.exp %24 : vector<8x4xf32>
    %26 = math.log1p %25 : vector<8x4xf32>
    %27 = arith.subf %21, %26 : vector<8x4xf32>
    %cst_12 = arith.constant dense<0.000000e+00> : vector<8xf32>
    %28 = vector.multi_reduction <add>, %27, %cst_12 [1] : vector<8x4xf32> to vector<8xf32>
    %29 = vector.shape_cast %28 : vector<8xf32> to vector<8x1xf32>
    %30 = arith.addf %12, %29 : vector<8x1xf32>
    %31 = vector.shape_cast %30 : vector<8x1xf32> to vector<1x8x1xf32>
    %cst_13 = arith.constant dense<0.000000e+00> : vector<1xf32>
    %32 = vector.multi_reduction <add>, %31, %cst_13 [1, 2] : vector<1x8x1xf32> to vector<1xf32>
    %33 = vector.shape_cast %32 : vector<1xf32> to vector<1x1x1xf32>
    %34 = vector.extract %33[0, 0, 0] : f32 from vector<1x1x1xf32>
    %35 = vector.broadcast %34 : f32 to vector<1x8x128xf32>
    %c0_14 = arith.constant 0 : index
    %c0_15 = arith.constant 0 : index
    %c0_16 = arith.constant 0 : index
    %36 = vector.load %arg4[%c0_14, %c0_15, %c0_16] : memref<1x8x128xf32, #tpu.memory_space<vmem>>, vector<1x8x128xf32>
    tpu.vector_store %arg4[%c0_14, %c0_15, %c0_16], %35 {strides = array<i32>} : memref<1x8x128xf32, #tpu.memory_space<vmem>>, vector<1x8x128xf32>,
    return
  }
  func.func @transform_0(%arg0: i32) -> (i32, i32) {
    %c0_i32 = arith.constant 0 : i32
    %c0_i32_0 = arith.constant 0 : i32
    return %arg0, %c0_i32 : i32, i32
  }
  func.func @transform_1(%arg0: i32) -> (i32, i32) {
    %c0_i32 = arith.constant 0 : i32
    %c0_i32_0 = arith.constant 0 : i32
    return %arg0, %c0_i32 : i32, i32
  }
  func.func @transform_2(%arg0: i32) -> (i32, i32, i32) {
    %c0_i32 = arith.constant 0 : i32
    %c0_i32_0 = arith.constant 0 : i32
    %c0_i32_1 = arith.constant 0 : i32
    return %arg0, %c0_i32, %c0_i32_0 : i32, i32, i32
  }
  func.func @transform_3(%arg0: i32) -> (i32, i32, i32) {
    %c0_i32 = arith.constant 0 : i32
    %c0_i32_0 = arith.constant 0 : i32
    %c0_i32_1 = arith.constant 0 : i32
    return %arg0, %c0_i32, %c0_i32_0 : i32, i32, i32
  }
}

</mosaic_0001>

<llo_original>
// kernel: tpu_custom_call.1
$region0: #{tpu_custom_call.1}
  #allocation0 [shape = 'u32[]', space=smem, size = 0x4, offset = 0x4, fixed_abs, tag = 'smem constant byte address 0x4 - core index']
  #allocation1 [shape = 'u32[144,128]{1,0:T(1,128)}', space=vmem, size = 0x12000, scoped, tag = 'internal scratch']
  %s0 = inlined_call_operand.hbm [shape: f32[8,32], index: 0, kind: input, shape index: {}]
  %s1 = inlined_call_operand.hbm [shape: f32[8,32], index: 1, kind: input, shape index: {}]
  %s2 = inlined_call_operand.hbm [shape: f32[8,4,32], index: 2, kind: input, shape index: {}]
  %s3 = inlined_call_operand.hbm [shape: f32[1,8,128], index: 3, kind: output, shape index: {}]
  %s4 = sld [smem:[#allocation0]]
  $region34: #{tpu_custom_call.1} parent=0
    _
  %s6 = ssub.s32 1, %s4
  %s7 = scalar_select 0, %s6, %s4
  $region1: #{tpu_custom_call.1} parent=0
    #allocation2 [shape = 'u8[4096]{0}', space=vmem, size = 0x1000, scoped, tag = 'input window, operand 0, single buffered']
    #allocation3 [shape = 's32[1]{0}', space=sflag, size = 0x4, scoped, tag = 'scoped memory for tpu_custom_call.1']
    #allocation4 [shape = 's32[1]{0}', space=sflag, size = 0x4, scoped, tag = 'scoped memory for tpu_custom_call.1']
    #allocation5 [shape = 'u8[4096]{0}', space=vmem, size = 0x1000, scoped, tag = 'input window, operand 1, single buffered']
    #allocation6 [shape = 's32[1]{0}', space=sflag, size = 0x4, scoped, tag = 'scoped memory for tpu_custom_call.1']
    #allocation7 [shape = 'u8[16384]{0}', space=vmem, size = 0x4000, scoped, tag = 'input window, operand 2, single buffered']
    #allocation8 [shape = 'u8[4096]{0}', space=vmem, size = 0x1000, scoped, tag = 'output window, operand 0, single buffered']
    %8 = vsyncpa [#allocation3], 0
    %9 = vsyncpa [#allocation6], 0
    %10 = vsyncpa [#allocation4], 0
    // Predicated region
    $region2: #{tpu_custom_call.1} parent=1 // pred_check
      _
    $region3: #{tpu_custom_call.1} parent=1 // pred_check_branch
      %12 = sbr.rel (0) target = $region5
    $region4: #{tpu_custom_call.1} parent=1 // pred_region
      %s14 = ssub.s32 128, 128
      %15 = vsyncadd [#allocation3], %s14
      %s17 = sshll.u32 [#allocation2], 4
      %s18 = int_to_ptr.vmem [resolvable:$true] %s17
      %20 = dma.hbm_to_vmem [thread:$0]  %s0, 128, %s18, [#allocation3]
    $region5: #{tpu_custom_call.1} parent=1 // pred_fallthru
      _
    // Predicated region
    $region6: #{tpu_custom_call.1} parent=1 // pred_check
      _
    $region7: #{tpu_custom_call.1} parent=1 // pred_check_branch
      %22 = sbr.rel (0) target = $region9
    $region8: #{tpu_custom_call.1} parent=1 // pred_region
      %s24 = ssub.s32 128, 128
      %25 = vsyncadd [#allocation6], %s24
      %s27 = sshll.u32 [#allocation5], 4
      %s28 = int_to_ptr.vmem [resolvable:$true] %s27
      %30 = dma.hbm_to_vmem [thread:$0]  %s1, 128, %s28, [#allocation6]
    $region9: #{tpu_custom_call.1} parent=1 // pred_fallthru
      _
    // Predicated region
    $region10: #{tpu_custom_call.1} parent=1 // pred_check
      _
    $region11: #{tpu_custom_call.1} parent=1 // pred_check_branch
      %32 = sbr.rel (0) target = $region13
    $region12: #{tpu_custom_call.1} parent=1 // pred_region
      %s34 = ssub.s32 512, 512
      %35 = vsyncadd [#allocation6], %s34
      %s36 = sshll.u32 [#allocation7], 4
      %s37 = int_to_ptr.vmem [resolvable:$true] %s36
      %42 = dma.hbm_to_vmem [thread:$0]  %s2, 512, %s37, [#allocation6], 64, 64, 4
    $region13: #{tpu_custom_call.1} parent=1 // pred_fallthru
      _
    // Predicated region
    $region14: #{tpu_custom_call.1} parent=1 // pred_check
      _
    $region15: #{tpu_custom_call.1} parent=1 // pred_check_branch
      %44 = sbr.rel (0) target = $region17
    $region16: #{tpu_custom_call.1} parent=1 // pred_region
      %45 = dma.done [#allocation3], 128
    $region17: #{tpu_custom_call.1} parent=1 // pred_fallthru
      _
    // Predicated region
    $region18: #{tpu_custom_call.1} parent=1 // pred_check
      _
    $region19: #{tpu_custom_call.1} parent=1 // pred_check_branch
      %47 = sbr.rel (0) target = $region21
    $region20: #{tpu_custom_call.1} parent=1 // pred_region
      %48 = dma.done [#allocation6], 128
    $region21: #{tpu_custom_call.1} parent=1 // pred_fallthru
      _
    // Predicated region
    $region22: #{tpu_custom_call.1} parent=1 // pred_check
      _
    $region23: #{tpu_custom_call.1} parent=1 // pred_check_branch
      %50 = sbr.rel (0) target = $region25
    $region24: #{tpu_custom_call.1} parent=1 // pred_region
      %51 = dma.done [#allocation6], 512
    $region25: #{tpu_custom_call.1} parent=1 // pred_fallthru
      _
    %v52 = vld [vmem:[#allocation2] sm:$0xff]
    %v53 = vld [vmem:[#allocation5] sm:$0xff]
    %v54 = vmul.f32 %v52, %v53
    %vm55 = vcmask 261120
    %v56 = vsel %vm55, %v54, 0.0
    %57 = vadd.xlane.f32.xlu0 %v56
    %v58 = vpop.xlane.xlu0 %57
    %v59 = vmin.f32 %v58, 0.0
    %v60 = vand.u32 2147483647, %v58
    %v61 = vsub.f32 0.0, %v60
    %v62 = vmul.f32 %v61, 1.442695
    %v63 = vpow.pop %v62
    %v64 = vadd.f32 %v63, 1.0
    %v65 = vlog2.pop %v64
    %v66 = vmul.f32 %v65, 0.6931472
    %v67 = vmul.f32 -0.5, %v63
    %v68 = vadd.f32 %v67, 1.0
    %v69 = vmul.f32 %v68, %v63
    %v70 = vand.u32 2147483647, %v63
    %vm71 = vcmp.lt.f32.partialorder %v70, 0.0004427343
    %v72 = vsel %vm71, %v69, %v66
    %v73 = vsub.f32 %v59, %v72
    %v74 = vld [vmem:[#allocation7] sm:$0xf]
    %v75 = vld [vmem:[#allocation7 + $0x4] sm:$0xf]
    %v76 = vld [vmem:[#allocation7 + $0x8] sm:$0xf]
    %v77 = vld [vmem:[#allocation7 + $0xc] sm:$0xf]
    %v78 = vld [vmem:[#allocation7 + $0x10] sm:$0xf]
    %v79 = vld [vmem:[#allocation7 + $0x14] sm:$0xf]
    %v80 = vld [vmem:[#allocation7 + $0x18] sm:$0xf]
    %v81 = vld [vmem:[#allocation7 + $0x1c] sm:$0xf]
    %v83 = vcombine.high %v52, %v52
    %v85 = vunpack.c.l.s4 1966171168
    %v86 = vunpack.c.0.s8 %v85
    %v87 = vlaneseq
    %v88 = vshrl.u32 %v87, 7
    %v89 = vsub.s32 %v86, %v88
    %v90 = vrot.slane %v52, %v89
    %v92 = vunpack.c.l.s4 1966171168
    %v93 = vunpack.c.0.s8 %v92
    %v94 = vlaneseq
    %v95 = vshrl.u32 %v94, 7
    %v96 = vsub.s32 %v93, %v95
    %v97 = vrot.slane %v83, %v96
    %v98 = vcombine.high %v90, %v90
    %v99 = vcombine.high %v97, %v97
    %v101 = vunpack.c.l.s4 1966171168
    %v102 = vunpack.c.0.s8 %v101
    %v103 = vlaneseq
    %v104 = vshrl.u32 %v103, 7
    %v105 = vsub.s32 %v102, %v104
    %v106 = vrot.slane %v90, %v105
    %v108 = vunpack.c.l.s4 1966171168
    %v109 = vunpack.c.0.s8 %v108
    %v110 = vlaneseq
    %v111 = vshrl.u32 %v110, 7
    %v112 = vsub.s32 %v109, %v111
    %v113 = vrot.slane %v97, %v112
    %v115 = vunpack.c.l.s4 1966171168
    %v116 = vunpack.c.0.s8 %v115
    %v117 = vlaneseq
    %v118 = vshrl.u32 %v117, 7
    %v119 = vsub.s32 %v116, %v118
    %v120 = vrot.slane %v98, %v119
    %v122 = vunpack.c.l.s4 1966171168
    %v123 = vunpack.c.0.s8 %v122
    %v124 = vlaneseq
    %v125 = vshrl.u32 %v124, 7
    %v126 = vsub.s32 %v123, %v125
    %v127 = vrot.slane %v99, %v126
    %v128 = vcombine.high %v106, %v106
    %v129 = vcombine.high %v113, %v113
    %v130 = vcombine.high %v120, %v120
    %v131 = vcombine.high %v127, %v127
    %v132 = vlaneseq
    %v133 = vshrl.u32 %v132, 7
    %v134 = vsub.s32 0, %v133
    %v135 = vrot.slane %v106, %v134
    %v136 = vlaneseq
    %v137 = vshrl.u32 %v136, 7
    %v138 = vsub.s32 0, %v137
    %v139 = vrot.slane %v120, %v138
    %v140 = vlaneseq
    %v141 = vshrl.u32 %v140, 7
    %v142 = vsub.s32 0, %v141
    %v143 = vrot.slane %v128, %v142
    %v144 = vlaneseq
    %v145 = vshrl.u32 %v144, 7
    %v146 = vsub.s32 0, %v145
    %v147 = vrot.slane %v130, %v146
    %v148 = vlaneseq
    %v149 = vshrl.u32 %v148, 7
    %v150 = vsub.s32 0, %v149
    %v151 = vrot.slane %v113, %v150
    %v152 = vlaneseq
    %v153 = vshrl.u32 %v152, 7
    %v154 = vsub.s32 0, %v153
    %v155 = vrot.slane %v127, %v154
    %v156 = vlaneseq
    %v157 = vshrl.u32 %v156, 7
    %v158 = vsub.s32 0, %v157
    %v159 = vrot.slane %v129, %v158
    %v160 = vlaneseq
    %v161 = vshrl.u32 %v160, 7
    %v162 = vsub.s32 0, %v161
    %v163 = vrot.slane %v131, %v162
    %v172 = vmul.f32 %v74, %v135
    %v173 = vmul.f32 %v75, %v139
    %v174 = vmul.f32 %v76, %v143
    %v175 = vmul.f32 %v77, %v147
    %v176 = vmul.f32 %v78, %v151
    %v177 = vmul.f32 %v79, %v155
    %v178 = vmul.f32 %v80, %v159
    %v179 = vmul.f32 %v81, %v163
    %vm180 = vcmask 257024
    %v181 = vsel %vm180, %v172, 0.0
    %182 = vadd.xlane.f32.xlu0 %v181
    %v183 = vpop.xlane.xlu0 %182
    %v184 = vsel %vm180, %v173, 0.0
    %185 = vadd.xlane.f32.xlu0 %v184
    %v186 = vpop.xlane.xlu0 %185
    %v187 = vsel %vm180, %v174, 0.0
    %188 = vadd.xlane.f32.xlu0 %v187
    %v189 = vpop.xlane.xlu0 %188
    %v190 = vsel %vm180, %v175, 0.0
    %191 = vadd.xlane.f32.xlu0 %v190
    %v192 = vpop.xlane.xlu0 %191
    %v193 = vsel %vm180, %v176, 0.0
    %194 = vadd.xlane.f32.xlu0 %v193
    %v195 = vpop.xlane.xlu0 %194
    %v196 = vsel %vm180, %v177, 0.0
    %197 = vadd.xlane.f32.xlu0 %v196
    %v198 = vpop.xlane.xlu0 %197
    %v199 = vsel %vm180, %v178, 0.0
    %200 = vadd.xlane.f32.xlu0 %v199
    %v201 = vpop.xlane.xlu0 %200
    %v202 = vsel %vm180, %v179, 0.0
    %203 = vadd.xlane.f32.xlu0 %v202
    %v204 = vpop.xlane.xlu0 %203
    %v205 = vsub.f32 0.0, %v183
    %v206 = vsub.f32 0.0, %v186
    %v207 = vsub.f32 0.0, %v189
    %v208 = vsub.f32 0.0, %v192
    %v209 = vsub.f32 0.0, %v195
    %v210 = vsub.f32 0.0, %v198
    %v211 = vsub.f32 0.0, %v201
    %v212 = vsub.f32 0.0, %v204
    %v213 = vmin.f32 %v205, 0.0
    %v214 = vmin.f32 %v206, 0.0
    %v215 = vmin.f32 %v207, 0.0
    %v216 = vmin.f32 %v208, 0.0
    %v217 = vmin.f32 %v209, 0.0
    %v218 = vmin.f32 %v210, 0.0
    %v219 = vmin.f32 %v211, 0.0
    %v220 = vmin.f32 %v212, 0.0
    %v221 = vand.u32 2147483647, %v205
    %v222 = vand.u32 2147483647, %v206
    %v223 = vand.u32 2147483647, %v207
    %v224 = vand.u32 2147483647, %v208
    %v225 = vand.u32 2147483647, %v209
    %v226 = vand.u32 2147483647, %v210
    %v227 = vand.u32 2147483647, %v211
    %v228 = vand.u32 2147483647, %v212
    %v229 = vsub.f32 0.0, %v221
    %v230 = vsub.f32 0.0, %v222
    %v231 = vsub.f32 0.0, %v223
    %v232 = vsub.f32 0.0, %v224
    %v233 = vsub.f32 0.0, %v225
    %v234 = vsub.f32 0.0, %v226
    %v235 = vsub.f32 0.0, %v227
    %v236 = vsub.f32 0.0, %v228
    %v237 = vmul.f32 %v229, 1.442695
    %v238 = vpow.pop %v237
    %v239 = vmul.f32 %v230, 1.442695
    %v240 = vpow.pop %v239
    %v241 = vmul.f32 %v231, 1.442695
    %v242 = vpow.pop %v241
    %v243 = vmul.f32 %v232, 1.442695
    %v244 = vpow.pop %v243
    %v245 = vmul.f32 %v233, 1.442695
    %v246 = vpow.pop %v245
    %v247 = vmul.f32 %v234, 1.442695
    %v248 = vpow.pop %v247
    %v249 = vmul.f32 %v235, 1.442695
    %v250 = vpow.pop %v249
    %v251 = vmul.f32 %v236, 1.442695
    %v252 = vpow.pop %v251
    %v253 = vadd.f32 %v238, 1.0
    %v254 = vlog2.pop %v253
    %v255 = vmul.f32 %v254, 0.6931472
    %v256 = vmul.f32 -0.5, %v238
    %v257 = vadd.f32 %v256, 1.0
    %v258 = vmul.f32 %v257, %v238
    %v259 = vand.u32 2147483647, %v238
    %vm260 = vcmp.lt.f32.partialorder %v259, 0.0004427343
    %v261 = vsel %vm260, %v258, %v255
    %v262 = vadd.f32 %v240, 1.0
    %v263 = vlog2.pop %v262
    %v264 = vmul.f32 %v263, 0.6931472
    %v265 = vmul.f32 -0.5, %v240
    %v266 = vadd.f32 %v265, 1.0
    %v267 = vmul.f32 %v266, %v240
    %v268 = vand.u32 2147483647, %v240
    %vm269 = vcmp.lt.f32.partialorder %v268, 0.0004427343
    %v270 = vsel %vm269, %v267, %v264
    %v271 = vadd.f32 %v242, 1.0
    %v272 = vlog2.pop %v271
    %v273 = vmul.f32 %v272, 0.6931472
    %v274 = vmul.f32 -0.5, %v242
    %v275 = vadd.f32 %v274, 1.0
    %v276 = vmul.f32 %v275, %v242
    %v277 = vand.u32 2147483647, %v242
    %vm278 = vcmp.lt.f32.partialorder %v277, 0.0004427343
    %v279 = vsel %vm278, %v276, %v273
    %v280 = vadd.f32 %v244, 1.0
    %v281 = vlog2.pop %v280
    %v282 = vmul.f32 %v281, 0.6931472
    %v283 = vmul.f32 -0.5, %v244
    %v284 = vadd.f32 %v283, 1.0
    %v285 = vmul.f32 %v284, %v244
    %v286 = vand.u32 2147483647, %v244
    %vm287 = vcmp.lt.f32.partialorder %v286, 0.0004427343
    %v288 = vsel %vm287, %v285, %v282
    %v289 = vadd.f32 %v246, 1.0
    %v290 = vlog2.pop %v289
    %v291 = vmul.f32 %v290, 0.6931472
    %v292 = vmul.f32 -0.5, %v246
    %v293 = vadd.f32 %v292, 1.0
    %v294 = vmul.f32 %v293, %v246
    %v295 = vand.u32 2147483647, %v246
    %vm296 = vcmp.lt.f32.partialorder %v295, 0.0004427343
    %v297 = vsel %vm296, %v294, %v291
    %v298 = vadd.f32 %v248, 1.0
    %v299 = vlog2.pop %v298
    %v300 = vmul.f32 %v299, 0.6931472
    %v301 = vmul.f32 -0.5, %v248
    %v302 = vadd.f32 %v301, 1.0
    %v303 = vmul.f32 %v302, %v248
    %v304 = vand.u32 2147483647, %v248
    %vm305 = vcmp.lt.f32.partialorder %v304, 0.0004427343
    %v306 = vsel %vm305, %v303, %v300
    %v307 = vadd.f32 %v250, 1.0
    %v308 = vlog2.pop %v307
    %v309 = vmul.f32 %v308, 0.6931472
    %v310 = vmul.f32 -0.5, %v250
    %v311 = vadd.f32 %v310, 1.0
    %v312 = vmul.f32 %v311, %v250
    %v313 = vand.u32 2147483647, %v250
    %vm314 = vcmp.lt.f32.partialorder %v313, 0.0004427343
    %v315 = vsel %vm314, %v312, %v309
    %v316 = vadd.f32 %v252, 1.0
    %v317 = vlog2.pop %v316
    %v318 = vmul.f32 %v317, 0.6931472
    %v319 = vmul.f32 -0.5, %v252
    %v320 = vadd.f32 %v319, 1.0
    %v321 = vmul.f32 %v320, %v252
    %v322 = vand.u32 2147483647, %v252
    %vm323 = vcmp.lt.f32.partialorder %v322, 0.0004427343
    %v324 = vsel %vm323, %v321, %v318
    %v325 = vsub.f32 %v213, %v261
    %v326 = vsub.f32 %v214, %v270
    %v327 = vsub.f32 %v215, %v279
    %v328 = vsub.f32 %v216, %v288
    %v329 = vsub.f32 %v217, %v297
    %v330 = vsub.f32 %v218, %v306
    %v331 = vsub.f32 %v219, %v315
    %v332 = vsub.f32 %v220, %v324
    %v341 = vlaneseq
    %v342 = vand.u32 %v341, 127
    %v343 = vlaneseq
    %v344 = vshrl.u32 %v343, 7
    %v345 = vsub.s32 %v342, %v344
    %v346 = vrot.slane %v325, %v345
    %v347 = vlaneseq
    %v348 = vshrl.u32 %v347, 7
    %v349 = vsub.s32 %v342, %v348
    %v350 = vrot.slane %v326, %v349
    %v351 = vlaneseq
    %v352 = vshrl.u32 %v351, 7
    %v353 = vsub.s32 %v342, %v352
    %v354 = vrot.slane %v327, %v353
    %v355 = vlaneseq
    %v356 = vshrl.u32 %v355, 7
    %v357 = vsub.s32 %v342, %v356
    %v358 = vrot.slane %v328, %v357
    %v359 = vlaneseq
    %v360 = vshrl.u32 %v359, 7
    %v361 = vsub.s32 %v342, %v360
    %v362 = vrot.slane %v329, %v361
    %v363 = vlaneseq
    %v364 = vshrl.u32 %v363, 7
    %v365 = vsub.s32 %v342, %v364
    %v366 = vrot.slane %v330, %v365
    %v367 = vlaneseq
    %v368 = vshrl.u32 %v367, 7
    %v369 = vsub.s32 %v342, %v368
    %v370 = vrot.slane %v331, %v369
    %v371 = vlaneseq
    %v372 = vshrl.u32 %v371, 7
    %v373 = vsub.s32 %v342, %v372
    %v374 = vrot.slane %v332, %v373
    %vm375 = vcmask 1041409
    %v376 = vsel %vm375, %v350, %v346
    %vm377 = vcmask 1042434
    %v378 = vsel %vm377, %v354, %v376
    %vm379 = vcmask 1043459
    %v380 = vsel %vm379, %v358, %v378
    %vm381 = vcmask 1044484
    %v382 = vsel %vm381, %v362, %v380
    %vm383 = vcmask 1045509
    %v384 = vsel %vm383, %v366, %v382
    %vm385 = vcmask 1046534
    %v386 = vsel %vm385, %v370, %v384
    %vm387 = vcmask 1047559
    %v388 = vsel %vm387, %v374, %v386
    %vm390 = vcmask 31744
    %v391 = vsel %vm390, %v388, 0.0
    %392 = vadd.xlane.f32.xlu0 %v391
    %v393 = vpop.xlane.xlu0 %392
    %v394 = vadd.f32 %v73, %v393
    %vm395 = vcmask 7168
    %v396 = vsel %vm395, %v394, 0.0
    %397 = vadd.xlane.f32.xlu0 %v396
    %v398 = vpop.xlane.xlu0 %397
    %v399 = vrot.slane %v398, 4
    %v400 = vadd.f32 %v398, %v399
    %v401 = vrot.slane %v400, 2
    %v402 = vadd.f32 %v400, %v401
    %v403 = vrot.slane %v402, 1
    %v404 = vadd.f32 %v402, %v403
    %s405 = vtos %v404
    %v406 = vstv %s405
    %407 = vst [vmem:[#allocation8] sm:$0xff] %v406
    // Predicated region
    $region26: #{tpu_custom_call.1} parent=1 // pred_check
      _
    $region27: #{tpu_custom_call.1} parent=1 // pred_check_branch
      %409 = sbr.rel (0) target = $region29
    $region28: #{tpu_custom_call.1} parent=1 // pred_region
      %s411 = ssub.s32 128, 128
      %412 = vsyncadd [#allocation4], %s411
      %s414 = sshll.u32 [#allocation8], 4
      %s415 = int_to_ptr.vmem [resolvable:$true] %s414
      %417 = dma.vmem_to_hbm [thread:$0]  %s415, 128, %s3, [#allocation4]
    $region29: #{tpu_custom_call.1} parent=1 // pred_fallthru
      _
    // Predicated region
    $region30: #{tpu_custom_call.1} parent=1 // pred_check
      _
    $region31: #{tpu_custom_call.1} parent=1 // pred_check_branch
      %419 = sbr.rel (0) target = $region33
    $region32: #{tpu_custom_call.1} parent=1 // pred_region
      %420 = dma.done [#allocation4], 128
    $region33: #{tpu_custom_call.1} parent=1 // pred_fallthru
      _
    %421 = vsyncpa [#allocation3], 1
    %422 = vsyncpa [#allocation6], 1
    %423 = vsyncpa [#allocation4], 1

</llo_original>
